<compile_context>
chip_gen: v7x
topology: tpu7x:2x2x1
jax: 0.10.0
libtpu: 0.0.40
codegen_flags: <defaults>
</compile_context>

<pallas_src>
import functools

import jax
import jax.numpy as jnp
from jax import lax
from jax.experimental import pallas as pl
from jax.experimental.pallas import tpu as pltpu


# Contract on the last dim of both operands (x @ W.T without materializing W.T).
_NT_DIMS = (((1,), (1,)), ((), ()))


def _cae_kernel(x_ref, w1_ref, w2_ref, h1_ref, h2_ref):
    # x_ref : (TB, D_in)   VMEM input tile
    # w1_ref: (H, D_in)    VMEM, resident across grid steps (fc1.weight)
    # w2_ref: (D_in, H)    VMEM, resident across grid steps (fc2.weight)
    # h1_ref: (TB, H)      VMEM output tile
    # h2_ref: (TB, D_in)   VMEM output tile
    x = x_ref[...]

    # Encoder: relu(x @ W1^T)  -- MXU, f32 accumulation.
    pre1 = lax.dot_general(x, w1_ref[...], _NT_DIMS,
                           preferred_element_type=jnp.float32)
    h1 = jnp.maximum(pre1, 0.0)
    h1_ref[...] = h1.astype(h1_ref.dtype)

    # Decoder: sigmoid(h1 @ W2^T) -- MXU, f32 accumulation; sigmoid via tanh (EUP).
    pre2 = lax.dot_general(h1.astype(w2_ref.dtype), w2_ref[...], _NT_DIMS,
                           preferred_element_type=jnp.float32)
    h2 = 0.5 * (jnp.tanh(0.5 * pre2) + 1.0)
    h2_ref[...] = h2.astype(h2_ref.dtype)


def _round_up(x, m):
    return ((x + m - 1) // m) * m


def _pick_batch_tile(requested_tb, batch, d_in, hidden, itemsize, budget_bytes):
    """Largest batch tile <= requested that keeps double-buffered VMEM in budget."""
    tb = min(requested_tb, _round_up(batch, 8))
    tb = max(8, _round_up(tb, 8))

    def vmem_bytes(t):
        # Weights (counted double-buffered to be conservative) + double-buffered
        # activation tiles (x, h1, h2).  h1/h2 outputs are f32.
        w = 2 * (d_in * hidden + hidden * d_in) * itemsize
        act_in = 2 * t * d_in * itemsize
        act_out = 2 * t * (hidden + d_in) * 4
        return w + act_in + act_out

    while tb > 8 and vmem_bytes(tb) > budget_bytes:
        tb //= 2
        tb = max(8, _round_up(tb, 8))
    return tb, vmem_bytes(tb)


@functools.partial(jax.jit, static_argnames=("block_b", "use_bf16"))
def contractive_autoencoder_forward(x, w1, w2, *, block_b=512, use_bf16=False):
    """Forward pass of ContractiveAutoencoder.

    x : (..., num_inputs) -- flattened to (B, num_inputs) like x.view(-1, D)
    w1: (num_hidden, num_inputs)   = fc1.weight   (PyTorch (out, in) layout)
    w2: (num_inputs, num_hidden)   = fc2.weight
    Returns (h1, h2) with h1: (B, num_hidden), h2: (B, num_inputs), float32.
    """
    num_hidden, num_inputs = w1.shape
    assert w2.shape == (num_inputs, num_hidden)

    x2d = x.reshape(-1, num_inputs)
    B = x2d.shape[0]

    compute_dtype = jnp.bfloat16 if use_bf16 else jnp.float32
    x2d = x2d.astype(compute_dtype)
    w1c = w1.astype(compute_dtype)
    w2c = w2.astype(compute_dtype)

    # VMEM budget: stay well under v7x's 64 MiB physical VMEM (also fine on
    # v5e/v6e's 128 MiB).
    vmem_budget = 48 * 1024 * 1024
    itemsize = jnp.dtype(compute_dtype).itemsize
    tb, vmem_needed = _pick_batch_tile(block_b, B, num_inputs, num_hidden,
                                       itemsize, vmem_budget)

    # Pad the batch up to a multiple of the tile (padded rows are zeros and are
    # sliced off after the call).
    b_pad = _round_up(max(B, tb), tb)
    if b_pad != B:
        x2d = jnp.pad(x2d, ((0, b_pad - B), (0, 0)))

    grid = (b_pad // tb,)

    cost = pl.CostEstimate(
        flops=4 * b_pad * num_inputs * num_hidden,            # two matmuls
        transcendentals=b_pad * num_inputs,                   # sigmoid (tanh)
        bytes_accessed=(b_pad * num_inputs * itemsize         # x
                        + 2 * num_hidden * num_inputs * itemsize   # w1, w2
                        + b_pad * num_hidden * 4               # h1 (f32 out)
                        + b_pad * num_inputs * 4),             # h2 (f32 out)
    )

    h1, h2 = pl.pallas_call(
        _cae_kernel,
        out_shape=(
            jax.ShapeDtypeStruct((b_pad, num_hidden), jnp.float32),
            jax.ShapeDtypeStruct((b_pad, num_inputs), jnp.float32),
        ),
        grid_spec=pltpu.PrefetchScalarGridSpec(
            num_scalar_prefetch=0,
            grid=grid,
            in_specs=[
                pl.BlockSpec((tb, num_inputs), lambda i: (i, 0)),          # x tile
                pl.BlockSpec((num_hidden, num_inputs), lambda i: (0, 0)),  # w1 resident
                pl.BlockSpec((num_inputs, num_hidden), lambda i: (0, 0)),  # w2 resident
            ],
            out_specs=[
                pl.BlockSpec((tb, num_hidden), lambda i: (i, 0)),
                pl.BlockSpec((tb, num_inputs), lambda i: (i, 0)),
            ],
        ),
        compiler_params=pltpu.CompilerParams(
            dimension_semantics=("parallel",),   # batch tiles independent (v7x: 2 TCs)
            vmem_limit_bytes=max(vmem_needed + (2 << 20), 16 << 20),
        ),
        cost_estimate=cost,
    )(x2d, w1c, w2c)

    if b_pad != B:
        h1 = h1[:B]
        h2 = h2[:B]
    return h1, h2


if __name__ == "__main__":
    # Module-consistent small shapes: num_inputs=256 (a 16x16 image flattened),
    # num_hidden_layer_inputs=128, batch=300 (exercises padding + grid > 1).
    B = 300
    num_inputs = 256
    num_hidden = 128

    key = jax.random.PRNGKey(0)
    kx, kw1, kw2 = jax.random.split(key, 3)

    # Higher-rank input to exercise the x.view(-1, num_inputs) flattening.
    x = jax.random.normal(kx, (B, 16, 16), dtype=jnp.float32)
    # PyTorch Linear weight layout: (out_features, in_features).
    w1 = jax.random.normal(kw1, (num_hidden, num_inputs), dtype=jnp.float32) * 0.05
    w2 = jax.random.normal(kw2, (num_inputs, num_hidden), dtype=jnp.float32) * 0.05

    h1, h2 = contractive_autoencoder_forward(x, w1, w2)
    jax.block_until_ready((h1, h2))

    # Reference check against plain JAX.
    x2d = x.reshape(-1, num_inputs)
    h1_ref = jnp.maximum(x2d @ w1.T, 0.0)
    h2_ref = jax.nn.sigmoid(h1_ref @ w2.T)
    assert h1.shape == (B, num_hidden) and h2.shape == (B, num_inputs)
    assert jnp.allclose(h1, h1_ref, atol=1e-5, rtol=1e-5)
    assert jnp.allclose(h2, h2_ref, atol=1e-5, rtol=1e-5)

    # bf16-operand path (v6e/v7x MXU fast path): looser tolerance by design.
    h1_bf, h2_bf = contractive_autoencoder_forward(x, w1, w2, use_bf16=True)
    jax.block_until_ready((h1_bf, h2_bf))
    assert jnp.allclose(h1_bf, h1_ref, atol=5e-2, rtol=5e-2)
    assert jnp.allclose(h2_bf, h2_ref, atol=5e-2, rtol=5e-2)

    print("KERNEL_OK")
</pallas_src>

<mosaic_0001>
module attributes {stable_mosaic.version = 11 : i64} {
  func.func @_cae_kernel(%arg0: i32, %arg1: memref<304x256xf32, #tpu.memory_space<vmem>>, %arg2: memref<128x256xf32, #tpu.memory_space<vmem>>, %arg3: memref<256x128xf32, #tpu.memory_space<vmem>>, %arg4: memref<304x128xf32, #tpu.memory_space<vmem>>, %arg5: memref<304x256xf32, #tpu.memory_space<vmem>>) attributes {dimension_semantics = [#tpu.dimension_semantics<parallel>], iteration_bounds = array<i64: 1>, scalar_prefetch = 0 : i64, scratch_operands = 0 : i64, tpu.core_type = #tpu.core_type<tc>, window_params = [{transform_indices = @transform_0, window_bounds = array<i64: 304, 256>}, {pipeline_mode = #tpu.pipeline_mode<synchronous>, transform_indices = @transform_1, window_bounds = array<i64: 128, 256>}, {pipeline_mode = #tpu.pipeline_mode<synchronous>, transform_indices = @transform_2, window_bounds = array<i64: 256, 128>}, {transform_indices = @transform_3, window_bounds = array<i64: 304, 128>}, {transform_indices = @transform_4, window_bounds = array<i64: 304, 256>}]} {
    %c0 = arith.constant 0 : index
    %c0_0 = arith.constant 0 : index
    %0 = vector.load %arg1[%c0, %c0_0] : memref<304x256xf32, #tpu.memory_space<vmem>>, vector<304x256xf32>
    %c0_1 = arith.constant 0 : index
    %c0_2 = arith.constant 0 : index
    %1 = vector.load %arg2[%c0_1, %c0_2] : memref<128x256xf32, #tpu.memory_space<vmem>>, vector<128x256xf32>
    %cst = arith.constant dense<0.000000e+00> : vector<304x128xf32>
    %2 = tpu.matmul %0, %1, %cst {dimension_numbers = #tpu.dot_dimension_numbers<[1], [1], [0], [0], [0, 0, 1, 0], [], []>} : vector<304x256xf32>, vector<128x256xf32>, vector<304x128xf32> -> vector<304x128xf32>
    %cst_3 = arith.constant 0.000000e+00 : f32
    %3 = vector.broadcast %cst_3 : f32 to vector<304x128xf32>
    %4 = arith.maximumf %2, %3 : vector<304x128xf32>
    %c0_4 = arith.constant 0 : index
    %c0_5 = arith.constant 0 : index
    %5 = vector.load %arg4[%c0_4, %c0_5] : memref<304x128xf32, #tpu.memory_space<vmem>>, vector<304x128xf32>
    tpu.vector_store %arg4[%c0_4, %c0_5], %4 {strides = array<i32>} : memref<304x128xf32, #tpu.memory_space<vmem>>, vector<304x128xf32>,
    %c0_6 = arith.constant 0 : index
    %c0_7 = arith.constant 0 : index
    %6 = vector.load %arg3[%c0_6, %c0_7] : memref<256x128xf32, #tpu.memory_space<vmem>>, vector<256x128xf32>
    %cst_8 = arith.constant dense<0.000000e+00> : vector<304x256xf32>
    %7 = tpu.matmul %4, %6, %cst_8 {dimension_numbers = #tpu.dot_dimension_numbers<[1], [1], [0], [0], [0, 0, 1, 0], [], []>} : vector<304x128xf32>, vector<256x128xf32>, vector<304x256xf32> -> vector<304x256xf32>
    %cst_9 = arith.constant 5.000000e-01 : f32
    %8 = vector.broadcast %cst_9 : f32 to vector<304x256xf32>
    %9 = arith.mulf %8, %7 : vector<304x256xf32>
    %10 = math.tanh %9 : vector<304x256xf32>
    %cst_10 = arith.constant 1.000000e+00 : f32
    %11 = vector.broadcast %cst_10 : f32 to vector<304x256xf32>
    %12 = arith.addf %10, %11 : vector<304x256xf32>
    %cst_11 = arith.constant 5.000000e-01 : f32
    %13 = vector.broadcast %cst_11 : f32 to vector<304x256xf32>
    %14 = arith.mulf %13, %12 : vector<304x256xf32>
    %c0_12 = arith.constant 0 : index
    %c0_13 = arith.constant 0 : index
    %15 = vector.load %arg5[%c0_12, %c0_13] : memref<304x256xf32, #tpu.memory_space<vmem>>, vector<304x256xf32>
    tpu.vector_store %arg5[%c0_12, %c0_13], %14 {strides = array<i32>} : memref<304x256xf32, #tpu.memory_space<vmem>>, vector<304x256xf32>,
    return
  }
  func.func @transform_0(%arg0: i32) -> (i32, i32) {
    %c0_i32 = arith.constant 0 : i32
    %c0_i32_0 = arith.constant 0 : i32
    return %arg0, %c0_i32 : i32, i32
  }
  func.func @transform_1(%arg0: i32) -> (i32, i32) {
    %c0_i32 = arith.constant 0 : i32
    %c0_i32_0 = arith.constant 0 : i32
    %c0_i32_1 = arith.constant 0 : i32
    return %c0_i32, %c0_i32_0 : i32, i32
  }
  func.func @transform_2(%arg0: i32) -> (i32, i32) {
    %c0_i32 = arith.constant 0 : i32
    %c0_i32_0 = arith.constant 0 : i32
    %c0_i32_1 = arith.constant 0 : i32
    return %c0_i32, %c0_i32_0 : i32, i32
  }
  func.func @transform_3(%arg0: i32) -> (i32, i32) {
    %c0_i32 = arith.constant 0 : i32
    %c0_i32_0 = arith.constant 0 : i32
    return %arg0, %c0_i32 : i32, i32
  }
  func.func @transform_4(%arg0: i32) -> (i32, i32) {
    %c0_i32 = arith.constant 0 : i32
    %c0_i32_0 = arith.constant 0 : i32
    return %arg0, %c0_i32 : i32, i32
  }
}

</mosaic_0001>

<llo_original>
// kernel: contractive_autoencoder_forward.1
$region0: #{contractive_autoencoder_forward.1}
  #allocation0 [shape = 'u32[]', space=smem, size = 0x4, offset = 0x4, fixed_abs, tag = 'smem constant byte address 0x4 - core index']
  #allocation1 [shape = 'u32[144,128]{1,0:T(1,128)}', space=vmem, size = 0x12000, scoped, tag = 'internal scratch']
  %s0 = inlined_call_operand.vmem [shape: f32[304,256], index: 0, kind: input, shape index: {}]
  %s1 = inlined_call_operand.vmem [shape: f32[128,256], index: 1, kind: input, shape index: {}]
  %s2 = inlined_call_operand.vmem [shape: f32[256,128], index: 2, kind: input, shape index: {}]
  %s3 = inlined_call_operand.hbm [shape: f32[304,128], index: 3, kind: output, shape index: {0}]
  %s4 = inlined_call_operand.hbm [shape: f32[304,256], index: 4, kind: output, shape index: {1}]
  %5 = xla_tuple %s3, %s4
  %s6 = sld [smem:[#allocation0]]
  $region30: #{contractive_autoencoder_forward.1} parent=0
    _
  %s8 = ssub.s32 1, %s6
  %s9 = scalar_select 0, %s8, %s6
  $region1: #{contractive_autoencoder_forward.1} parent=0
    #allocation2 [shape = 'u8[155648]{0}', space=vmem, size = 0x26000, scoped, tag = 'output window, operand 0, single buffered']
    #allocation3 [shape = 's32[1]{0}', space=sflag, size = 0x4, scoped, tag = 'scoped memory for contractive_autoencoder_forward.1']
    #allocation4 [shape = 'u8[311296]{0}', space=vmem, size = 0x4c000, scoped, tag = 'output window, operand 1, single buffered']
    #allocation5 [shape = 's32[1]{0}', space=sflag, size = 0x4, scoped, tag = 'scoped memory for contractive_autoencoder_forward.1']
    %10 = vsyncpa [#allocation3], 0
    %11 = vsyncpa [#allocation5], 0
    // Predicated region
    $region2: #{contractive_autoencoder_forward.1} parent=1 // pred_check
      _
    $region3: #{contractive_autoencoder_forward.1} parent=1 // pred_check_branch
      %13 = sbr.rel (0) target = $region5
    $region4: #{contractive_autoencoder_forward.1} parent=1 // pred_region
      _
    $region5: #{contractive_autoencoder_forward.1} parent=1 // pred_fallthru
      _
    // Predicated region
    $region6: #{contractive_autoencoder_forward.1} parent=1 // pred_check
      _
    $region7: #{contractive_autoencoder_forward.1} parent=1 // pred_check_branch
      %15 = sbr.rel (0) target = $region9
    $region8: #{contractive_autoencoder_forward.1} parent=1 // pred_region
      _
    $region9: #{contractive_autoencoder_forward.1} parent=1 // pred_fallthru
      _
    // Predicated region
    $region10: #{contractive_autoencoder_forward.1} parent=1 // pred_check
      _
    $region11: #{contractive_autoencoder_forward.1} parent=1 // pred_check_branch
      %17 = sbr.rel (0) target = $region13
    $region12: #{contractive_autoencoder_forward.1} parent=1 // pred_region
      _
    $region13: #{contractive_autoencoder_forward.1} parent=1 // pred_fallthru
      _
    %v18 = vld [vmem:[%s0] sm:$0xff]
    %v19 = vld [vmem:[%s0 + $0x8] sm:$0xff]
    %v20 = vld [vmem:[%s0 + $0x10] sm:$0xff]
    %v21 = vld [vmem:[%s0 + $0x18] sm:$0xff]
    %v22 = vld [vmem:[%s0 + $0x20] sm:$0xff]
    %v23 = vld [vmem:[%s0 + $0x28] sm:$0xff]
    %v24 = vld [vmem:[%s0 + $0x30] sm:$0xff]
    %v25 = vld [vmem:[%s0 + $0x38] sm:$0xff]
    %v26 = vld [vmem:[%s0 + $0x40] sm:$0xff]
    %v27 = vld [vmem:[%s0 + $0x48] sm:$0xff]
    %v28 = vld [vmem:[%s0 + $0x50] sm:$0xff]
    %v29 = vld [vmem:[%s0 + $0x58] sm:$0xff]
    %v30 = vld [vmem:[%s0 + $0x60] sm:$0xff]
    %v31 = vld [vmem:[%s0 + $0x68] sm:$0xff]
    %v32 = vld [vmem:[%s0 + $0x70] sm:$0xff]
    %v33 = vld [vmem:[%s0 + $0x78] sm:$0xff]
    %v34 = vld [vmem:[%s0 + $0x80] sm:$0xff]
    %v35 = vld [vmem:[%s0 + $0x88] sm:$0xff]
    %v36 = vld [vmem:[%s0 + $0x90] sm:$0xff]
    %v37 = vld [vmem:[%s0 + $0x98] sm:$0xff]
    %v38 = vld [vmem:[%s0 + $0xa0] sm:$0xff]
    %v39 = vld [vmem:[%s0 + $0xa8] sm:$0xff]
    %v40 = vld [vmem:[%s0 + $0xb0] sm:$0xff]
    %v41 = vld [vmem:[%s0 + $0xb8] sm:$0xff]
    %v42 = vld [vmem:[%s0 + $0xc0] sm:$0xff]
    %v43 = vld [vmem:[%s0 + $0xc8] sm:$0xff]
    %v44 = vld [vmem:[%s0 + $0xd0] sm:$0xff]
    %v45 = vld [vmem:[%s0 + $0xd8] sm:$0xff]
    %v46 = vld [vmem:[%s0 + $0xe0] sm:$0xff]
    %v47 = vld [vmem:[%s0 + $0xe8] sm:$0xff]
    %v48 = vld [vmem:[%s0 + $0xf0] sm:$0xff]
    %v49 = vld [vmem:[%s0 + $0xf8] sm:$0xff]
    %v50 = vld [vmem:[%s0 + $0x100] sm:$0xff]
    %v51 = vld [vmem:[%s0 + $0x108] sm:$0xff]
    %v52 = vld [vmem:[%s0 + $0x110] sm:$0xff]
    %v53 = vld [vmem:[%s0 + $0x118] sm:$0xff]
    %v54 = vld [vmem:[%s0 + $0x120] sm:$0xff]
    %v55 = vld [vmem:[%s0 + $0x128] sm:$0xff]
    %v56 = vld [vmem:[%s0 + $0x130] sm:$0xff]
    %v57 = vld [vmem:[%s0 + $0x138] sm:$0xff]
    %v58 = vld [vmem:[%s0 + $0x140] sm:$0xff]
    %v59 = vld [vmem:[%s0 + $0x148] sm:$0xff]
    %v60 = vld [vmem:[%s0 + $0x150] sm:$0xff]
    %v61 = vld [vmem:[%s0 + $0x158] sm:$0xff]
    %v62 = vld [vmem:[%s0 + $0x160] sm:$0xff]
    %v63 = vld [vmem:[%s0 + $0x168] sm:$0xff]
    %v64 = vld [vmem:[%s0 + $0x170] sm:$0xff]
    %v65 = vld [vmem:[%s0 + $0x178] sm:$0xff]
    %v66 = vld [vmem:[%s0 + $0x180] sm:$0xff]
    %v67 = vld [vmem:[%s0 + $0x188] sm:$0xff]
    %v68 = vld [vmem:[%s0 + $0x190] sm:$0xff]
    %v69 = vld [vmem:[%s0 + $0x198] sm:$0xff]
    %v70 = vld [vmem:[%s0 + $0x1a0] sm:$0xff]
    %v71 = vld [vmem:[%s0 + $0x1a8] sm:$0xff]
    %v72 = vld [vmem:[%s0 + $0x1b0] sm:$0xff]
    %v73 = vld [vmem:[%s0 + $0x1b8] sm:$0xff]
    %v74 = vld [vmem:[%s0 + $0x1c0] sm:$0xff]
    %v75 = vld [vmem:[%s0 + $0x1c8] sm:$0xff]
    %v76 = vld [vmem:[%s0 + $0x1d0] sm:$0xff]
    %v77 = vld [vmem:[%s0 + $0x1d8] sm:$0xff]
    %v78 = vld [vmem:[%s0 + $0x1e0] sm:$0xff]
    %v79 = vld [vmem:[%s0 + $0x1e8] sm:$0xff]
    %v80 = vld [vmem:[%s0 + $0x1f0] sm:$0xff]
    %v81 = vld [vmem:[%s0 + $0x1f8] sm:$0xff]
    %v82 = vld [vmem:[%s0 + $0x200] sm:$0xff]
    %v83 = vld [vmem:[%s0 + $0x208] sm:$0xff]
    %v84 = vld [vmem:[%s0 + $0x210] sm:$0xff]
    %v85 = vld [vmem:[%s0 + $0x218] sm:$0xff]
    %v86 = vld [vmem:[%s0 + $0x220] sm:$0xff]
    %v87 = vld [vmem:[%s0 + $0x228] sm:$0xff]
    %v88 = vld [vmem:[%s0 + $0x230] sm:$0xff]
    %v89 = vld [vmem:[%s0 + $0x238] sm:$0xff]
    %v90 = vld [vmem:[%s0 + $0x240] sm:$0xff]
    %v91 = vld [vmem:[%s0 + $0x248] sm:$0xff]
    %v92 = vld [vmem:[%s0 + $0x250] sm:$0xff]
    %v93 = vld [vmem:[%s0 + $0x258] sm:$0xff]
    %v94 = vld [vmem:[%s1] sm:$0xff]
    %v95 = vld [vmem:[%s1 + $0x8] sm:$0xff]
    %v96 = vld [vmem:[%s1 + $0x10] sm:$0xff]
    %v97 = vld [vmem:[%s1 + $0x18] sm:$0xff]
    %v98 = vld [vmem:[%s1 + $0x20] sm:$0xff]
    %v99 = vld [vmem:[%s1 + $0x28] sm:$0xff]
    %v100 = vld [vmem:[%s1 + $0x30] sm:$0xff]
    %v101 = vld [vmem:[%s1 + $0x38] sm:$0xff]
    %v102 = vld [vmem:[%s1 + $0x40] sm:$0xff]
    %v103 = vld [vmem:[%s1 + $0x48] sm:$0xff]
    %v104 = vld [vmem:[%s1 + $0x50] sm:$0xff]
    %v105 = vld [vmem:[%s1 + $0x58] sm:$0xff]
    %v106 = vld [vmem:[%s1 + $0x60] sm:$0xff]
    %v107 = vld [vmem:[%s1 + $0x68] sm:$0xff]
    %v108 = vld [vmem:[%s1 + $0x70] sm:$0xff]
    %v109 = vld [vmem:[%s1 + $0x78] sm:$0xff]
    %v110 = vld [vmem:[%s1 + $0x80] sm:$0xff]
    %v111 = vld [vmem:[%s1 + $0x88] sm:$0xff]
    %v112 = vld [vmem:[%s1 + $0x90] sm:$0xff]
    %v113 = vld [vmem:[%s1 + $0x98] sm:$0xff]
    %v114 = vld [vmem:[%s1 + $0xa0] sm:$0xff]
    %v115 = vld [vmem:[%s1 + $0xa8] sm:$0xff]
    %v116 = vld [vmem:[%s1 + $0xb0] sm:$0xff]
    %v117 = vld [vmem:[%s1 + $0xb8] sm:$0xff]
    %v118 = vld [vmem:[%s1 + $0xc0] sm:$0xff]
    %v119 = vld [vmem:[%s1 + $0xc8] sm:$0xff]
    %v120 = vld [vmem:[%s1 + $0xd0] sm:$0xff]
    %v121 = vld [vmem:[%s1 + $0xd8] sm:$0xff]
    %v122 = vld [vmem:[%s1 + $0xe0] sm:$0xff]
    %v123 = vld [vmem:[%s1 + $0xe8] sm:$0xff]
    %v124 = vld [vmem:[%s1 + $0xf0] sm:$0xff]
    %v125 = vld [vmem:[%s1 + $0xf8] sm:$0xff]
    %126 = vmatprep.subr.mxu0 %v95
    %127 = vmatpush1.xpose.msra.mxu0 %v94
    %128 = vmatprep.subr.mxu0 %v97
    %129 = vmatpush1.xpose.msra.mxu0 %v96
    %130 = vmatprep.subr.mxu0 %v99
    %131 = vmatpush1.xpose.msra.mxu0 %v98
    %132 = vmatprep.subr.mxu0 %v101
    %133 = vmatpush1.xpose.msra.mxu0 %v100
    %134 = vmatprep.subr.mxu0 %v103
    %135 = vmatpush1.xpose.msra.mxu0 %v102
    %136 = vmatprep.subr.mxu0 %v105
    %137 = vmatpush1.xpose.msra.mxu0 %v104
    %138 = vmatprep.subr.mxu0 %v107
    %139 = vmatpush1.xpose.msra.mxu0 %v106
    %140 = vmatprep.subr.mxu0 %v109
    %141 = vmatpush1.xpose.msra.mxu0 %v108
    %142 = vmatprep.subr.mxu0 %v111
    %143 = vmatpush1.xpose.msra.mxu0 %v110
    %144 = vmatprep.subr.mxu0 %v113
    %145 = vmatpush1.xpose.msra.mxu0 %v112
    %146 = vmatprep.subr.mxu0 %v115
    %147 = vmatpush1.xpose.msra.mxu0 %v114
    %148 = vmatprep.subr.mxu0 %v117
    %149 = vmatpush1.xpose.msra.mxu0 %v116
    %150 = vmatprep.subr.mxu0 %v119
    %151 = vmatpush1.xpose.msra.mxu0 %v118
    %152 = vmatprep.subr.mxu0 %v121
    %153 = vmatpush1.xpose.msra.mxu0 %v120
    %154 = vmatprep.subr.mxu0 %v123
    %155 = vmatpush1.xpose.msra.mxu0 %v122
    %156 = vmatprep.subr.mxu0 %v125
    %157 = vmatpush1.xpose.msra.mxu0 %v124
    %158 = vmatprep.subr.mxu0 0.0
    %159 = vmatpush1.xpose.msra.mxu0 0.0
    %160 = vmatprep.subr.mxu0 0.0
    %161 = vmatpush1.xpose.msra.mxu0 0.0
    %162 = vmatprep.subr.mxu0 0.0
    %163 = vmatpush1.xpose.msra.mxu0 0.0
    %164 = vmatprep.subr.mxu0 0.0
    %165 = vmatpush1.xpose.msra.mxu0 0.0
    %166 = vmatprep.subr.mxu0 0.0
    %167 = vmatpush1.xpose.msra.mxu0 0.0
    %168 = vmatprep.subr.mxu0 0.0
    %169 = vmatpush1.xpose.msra.mxu0 0.0
    %170 = vmatprep.subr.mxu0 0.0
    %171 = vmatpush1.xpose.msra.mxu0 0.0
    %172 = vmatprep.subr.mxu0 0.0
    %173 = vmatpush1.xpose.msra.mxu0 0.0
    %174 = vmatprep.subr.mxu0 0.0
    %175 = vmatpush1.xpose.msra.mxu0 0.0
    %176 = vmatprep.subr.mxu0 0.0
    %177 = vmatpush1.xpose.msra.mxu0 0.0
    %178 = vmatprep.subr.mxu0 0.0
    %179 = vmatpush1.xpose.msra.mxu0 0.0
    %180 = vmatprep.subr.mxu0 0.0
    %181 = vmatpush1.xpose.msra.mxu0 0.0
    %182 = vmatprep.subr.mxu0 0.0
    %183 = vmatpush1.xpose.msra.mxu0 0.0
    %184 = vmatprep.subr.mxu0 0.0
    %185 = vmatpush1.xpose.msra.mxu0 0.0
    %186 = vmatprep.subr.mxu0 0.0
    %187 = vmatpush1.xpose.msra.mxu0 0.0
    %188 = vmatprep.subr.mxu0 0.0
    %189 = vmatpush1.xpose.msra.mxu0 0.0
    %190 = vmatprep.mubr.f32.mxu0 %v19
    %191 = vmatmul.mubr.f32.gmra.mrb[0].mxu0 %v18
    %v192 = vpop.f32.mrb[0].mxu0
    %v193 = vadd.f32 0.0, %v192
    %v194 = vpop.f32.mrb[0].mxu0
    %195 = vmatprep.mubr.f32.mxu0 %v21
    %196 = vmatmul.mubr.f32.gmra.mrb[0].mxu0 %v20
    %v197 = vpop.f32.mrb[0].mxu0
    %v198 = vadd.f32 0.0, %v197
    %v199 = vpop.f32.mrb[0].mxu0
    %200 = vmatprep.mubr.f32.mxu0 %v23
    %201 = vmatmul.mubr.f32.gmra.mrb[0].mxu0 %v22
    %v202 = vpop.f32.mrb[0].mxu0
    %v203 = vadd.f32 0.0, %v202
    %v204 = vpop.f32.mrb[0].mxu0
    %205 = vmatprep.mubr.f32.mxu0 %v25
    %206 = vmatmul.mubr.f32.gmra.mrb[0].mxu0 %v24
    %v207 = vpop.f32.mrb[0].mxu0
    %v208 = vadd.f32 0.0, %v207
    %v209 = vpop.f32.mrb[0].mxu0
    %210 = vmatprep.mubr.f32.mxu0 %v27
    %211 = vmatmul.mubr.f32.gmra.mrb[0].mxu0 %v26
    %v212 = vpop.f32.mrb[0].mxu0
    %v213 = vadd.f32 0.0, %v212
    %v214 = vpop.f32.mrb[0].mxu0
    %215 = vmatprep.mubr.f32.mxu0 %v29
    %216 = vmatmul.mubr.f32.gmra.mrb[0].mxu0 %v28
    %v217 = vpop.f32.mrb[0].mxu0
    %v218 = vadd.f32 0.0, %v217
    %v219 = vpop.f32.mrb[0].mxu0
    %220 = vmatprep.mubr.f32.mxu0 %v31
    %221 = vmatmul.mubr.f32.gmra.mrb[0].mxu0 %v30
    %v222 = vpop.f32.mrb[0].mxu0
    %v223 = vadd.f32 0.0, %v222
    %v224 = vpop.f32.mrb[0].mxu0
    %225 = vmatprep.mubr.f32.mxu0 %v33
    %226 = vmatmul.mubr.f32.gmra.mrb[0].mxu0 %v32
    %v227 = vpop.f32.mrb[0].mxu0
    %v228 = vadd.f32 0.0, %v227
    %v229 = vpop.f32.mrb[0].mxu0
    %230 = vmatprep.mubr.f32.mxu0 %v35
    %231 = vmatmul.mubr.f32.gmra.mrb[0].mxu0 %v34
    %v232 = vpop.f32.mrb[0].mxu0
    %v233 = vadd.f32 0.0, %v232
    %v234 = vpop.f32.mrb[0].mxu0
    %235 = vmatprep.mubr.f32.mxu0 %v37
    %236 = vmatmul.mubr.f32.gmra.mrb[0].mxu0 %v36
    %v237 = vpop.f32.mrb[0].mxu0
    %v238 = vadd.f32 0.0, %v237
    %v239 = vpop.f32.mrb[0].mxu0
    %240 = vmatprep.mubr.f32.mxu0 %v39
    %241 = vmatmul.mubr.f32.gmra.mrb[0].mxu0 %v38
    %v242 = vpop.f32.mrb[0].mxu0
    %v243 = vadd.f32 0.0, %v242
    %v244 = vpop.f32.mrb[0].mxu0
    %245 = vmatprep.mubr.f32.mxu0 %v41
    %246 = vmatmul.mubr.f32.gmra.mrb[0].mxu0 %v40
    %v247 = vpop.f32.mrb[0].mxu0
    %v248 = vadd.f32 0.0, %v247
    %v249 = vpop.f32.mrb[0].mxu0
    %250 = vmatprep.mubr.f32.mxu0 %v43
    %251 = vmatmul.mubr.f32.gmra.mrb[0].mxu0 %v42
    %v252 = vpop.f32.mrb[0].mxu0
    %v253 = vadd.f32 0.0, %v252
    %v254 = vpop.f32.mrb[0].mxu0
    %255 = vmatprep.mubr.f32.mxu0 %v45
    %256 = vmatmul.mubr.f32.gmra.mrb[0].mxu0 %v44
    %v257 = vpop.f32.mrb[0].mxu0
    %v258 = vadd.f32 0.0, %v257
    %v259 = vpop.f32.mrb[0].mxu0
    %260 = vmatprep.mubr.f32.mxu0 %v47
    %261 = vmatmul.mubr.f32.gmra.mrb[0].mxu0 %v46
    %v262 = vpop.f32.mrb[0].mxu0
    %v263 = vadd.f32 0.0, %v262
    %v264 = vpop.f32.mrb[0].mxu0
    %265 = vmatprep.mubr.f32.mxu0 %v49
    %266 = vmatmul.mubr.f32.gmra.mrb[0].mxu0 %v48
    %v267 = vpop.f32.mrb[0].mxu0
    %v268 = vadd.f32 0.0, %v267
    %v269 = vpop.f32.mrb[0].mxu0
    %270 = vmatprep.mubr.f32.mxu0 %v51
    %271 = vmatmul.mubr.f32.gmra.mrb[0].mxu0 %v50
    %v272 = vpop.f32.mrb[0].mxu0
    %v273 = vadd.f32 0.0, %v272
    %v274 = vpop.f32.mrb[0].mxu0
    %275 = vmatprep.mubr.f32.mxu0 %v53
    %276 = vmatmul.mubr.f32.gmra.mrb[0].mxu0 %v52
    %v277 = vpop.f32.mrb[0].mxu0
    %v278 = vadd.f32 0.0, %v277
    %v279 = vpop.f32.mrb[0].mxu0
    %280 = vmatprep.mubr.f32.mxu0 %v55
    %281 = vmatmul.mubr.f32.gmra.mrb[0].mxu0 %v54
    %v282 = vpop.f32.mrb[0].mxu0
    %v283 = vadd.f32 0.0, %v282
    %v284 = vpop.f32.mrb[0].mxu0
    %285 = vmatprep.mubr.f32.mxu0 %v57
    %286 = vmatmul.mubr.f32.gmra.mrb[0].mxu0 %v56
    %v287 = vpop.f32.mrb[0].mxu0
    %v288 = vadd.f32 0.0, %v287
    %v289 = vpop.f32.mrb[0].mxu0
    %290 = vmatprep.mubr.f32.mxu0 %v59
    %291 = vmatmul.mubr.f32.gmra.mrb[0].mxu0 %v58
    %v292 = vpop.f32.mrb[0].mxu0
    %v293 = vadd.f32 0.0, %v292
    %v294 = vpop.f32.mrb[0].mxu0
    %295 = vmatprep.mubr.f32.mxu0 %v61
    %296 = vmatmul.mubr.f32.gmra.mrb[0].mxu0 %v60
    %v297 = vpop.f32.mrb[0].mxu0
    %v298 = vadd.f32 0.0, %v297
    %v299 = vpop.f32.mrb[0].mxu0
    %300 = vmatprep.mubr.f32.mxu0 %v63
    %301 = vmatmul.mubr.f32.gmra.mrb[0].mxu0 %v62
    %v302 = vpop.f32.mrb[0].mxu0
    %v303 = vadd.f32 0.0, %v302
    %v304 = vpop.f32.mrb[0].mxu0
    %305 = vmatprep.mubr.f32.mxu0 %v65
    %306 = vmatmul.mubr.f32.gmra.mrb[0].mxu0 %v64
    %v307 = vpop.f32.mrb[0].mxu0
    %v308 = vadd.f32 0.0, %v307
    %v309 = vpop.f32.mrb[0].mxu0
    %310 = vmatprep.mubr.f32.mxu0 %v67
    %311 = vmatmul.mubr.f32.gmra.mrb[0].mxu0 %v66
    %v312 = vpop.f32.mrb[0].mxu0
    %v313 = vadd.f32 0.0, %v312
    %v314 = vpop.f32.mrb[0].mxu0
    %315 = vmatprep.mubr.f32.mxu0 %v69
    %316 = vmatmul.mubr.f32.gmra.mrb[0].mxu0 %v68
    %v317 = vpop.f32.mrb[0].mxu0
    %v318 = vadd.f32 0.0, %v317
    %v319 = vpop.f32.mrb[0].mxu0
    %320 = vmatprep.mubr.f32.mxu0 %v71
    %321 = vmatmul.mubr.f32.gmra.mrb[0].mxu0 %v70
    %v322 = vpop.f32.mrb[0].mxu0
    %v323 = vadd.f32 0.0, %v322
    %v324 = vpop.f32.mrb[0].mxu0
    %325 = vmatprep.mubr.f32.mxu0 %v73
    %326 = vmatmul.mubr.f32.gmra.mrb[0].mxu0 %v72
    %v327 = vpop.f32.mrb[0].mxu0
    %v328 = vadd.f32 0.0, %v327
    %v329 = vpop.f32.mrb[0].mxu0
    %330 = vmatprep.mubr.f32.mxu0 %v75
    %331 = vmatmul.mubr.f32.gmra.mrb[0].mxu0 %v74
    %v332 = vpop.f32.mrb[0].mxu0
    %v333 = vadd.f32 0.0, %v332
    %v334 = vpop.f32.mrb[0].mxu0
    %335 = vmatprep.mubr.f32.mxu0 %v77
    %336 = vmatmul.mubr.f32.gmra.mrb[0].mxu0 %v76
    %v337 = vpop.f32.mrb[0].mxu0
    %v338 = vadd.f32 0.0, %v337
    %v339 = vpop.f32.mrb[0].mxu0
    %340 = vmatprep.mubr.f32.mxu0 %v79
    %341 = vmatmul.mubr.f32.gmra.mrb[0].mxu0 %v78
    %v342 = vpop.f32.mrb[0].mxu0
    %v343 = vadd.f32 0.0, %v342
    %v344 = vpop.f32.mrb[0].mxu0
    %345 = vmatprep.mubr.f32.mxu0 %v81
    %346 = vmatmul.mubr.f32.gmra.mrb[0].mxu0 %v80
    %v347 = vpop.f32.mrb[0].mxu0
    %v348 = vadd.f32 0.0, %v347
    %v349 = vpop.f32.mrb[0].mxu0
    %350 = vmatprep.mubr.f32.mxu0 %v83
    %351 = vmatmul.mubr.f32.gmra.mrb[0].mxu0 %v82
    %v352 = vpop.f32.mrb[0].mxu0
    %v353 = vadd.f32 0.0, %v352
    %v354 = vpop.f32.mrb[0].mxu0
    %355 = vmatprep.mubr.f32.mxu0 %v85
    %356 = vmatmul.mubr.f32.gmra.mrb[0].mxu0 %v84
    %v357 = vpop.f32.mrb[0].mxu0
    %v358 = vadd.f32 0.0, %v357
    %v359 = vpop.f32.mrb[0].mxu0
    %360 = vmatprep.mubr.f32.mxu0 %v87
    %361 = vmatmul.mubr.f32.gmra.mrb[0].mxu0 %v86
    %v362 = vpop.f32.mrb[0].mxu0
    %v363 = vadd.f32 0.0, %v362
    %v364 = vpop.f32.mrb[0].mxu0
    %365 = vmatprep.mubr.f32.mxu0 %v89
    %366 = vmatmul.mubr.f32.gmra.mrb[0].mxu0 %v88
    %v367 = vpop.f32.mrb[0].mxu0
    %v368 = vadd.f32 0.0, %v367
    %v369 = vpop.f32.mrb[0].mxu0
    %370 = vmatprep.mubr.f32.mxu0 %v91
    %371 = vmatmul.mubr.f32.gmra.mrb[0].mxu0 %v90
    %v372 = vpop.f32.mrb[0].mxu0
    %v373 = vadd.f32 0.0, %v372
    %v374 = vpop.f32.mrb[0].mxu0
    %375 = vmatprep.mubr.f32.mxu0 %v93
    %376 = vmatmul.mubr.f32.gmra.mrb[0].mxu0 %v92
    %v377 = vpop.f32.mrb[0].mxu0
    %v378 = vadd.f32 0.0, %v377
    %v379 = vpop.f32.mrb[0].mxu0
    %380 = vdwg.mxu0
    %v381 = vmax.f32 %v193, 0.0
    %v382 = vmax.f32 %v198, 0.0
    %v383 = vmax.f32 %v203, 0.0
    %v384 = vmax.f32 %v208, 0.0
    %v385 = vmax.f32 %v213, 0.0
    %v386 = vmax.f32 %v218, 0.0
    %v387 = vmax.f32 %v223, 0.0
    %v388 = vmax.f32 %v228, 0.0
    %v389 = vmax.f32 %v233, 0.0
    %v390 = vmax.f32 %v238, 0.0
    %v391 = vmax.f32 %v243, 0.0
    %v392 = vmax.f32 %v248, 0.0
    %v393 = vmax.f32 %v253, 0.0
    %v394 = vmax.f32 %v258, 0.0
    %v395 = vmax.f32 %v263, 0.0
    %v396 = vmax.f32 %v268, 0.0
    %v397 = vmax.f32 %v273, 0.0
    %v398 = vmax.f32 %v278, 0.0
    %v399 = vmax.f32 %v283, 0.0
    %v400 = vmax.f32 %v288, 0.0
    %v401 = vmax.f32 %v293, 0.0
    %v402 = vmax.f32 %v298, 0.0
    %v403 = vmax.f32 %v303, 0.0
    %v404 = vmax.f32 %v308, 0.0
    %v405 = vmax.f32 %v313, 0.0
    %v406 = vmax.f32 %v318, 0.0
    %v407 = vmax.f32 %v323, 0.0
    %v408 = vmax.f32 %v328, 0.0
    %v409 = vmax.f32 %v333, 0.0
    %v410 = vmax.f32 %v338, 0.0
    %v411 = vmax.f32 %v343, 0.0
    %v412 = vmax.f32 %v348, 0.0
    %v413 = vmax.f32 %v353, 0.0
    %v414 = vmax.f32 %v358, 0.0
    %v415 = vmax.f32 %v363, 0.0
    %v416 = vmax.f32 %v368, 0.0
    %v417 = vmax.f32 %v373, 0.0
    %v418 = vmax.f32 %v378, 0.0
    %419 = vst [vmem:[#allocation2] sm:$0xff] %v381
    %420 = vst [vmem:[#allocation2 + $0x8] sm:$0xff] %v382
    %421 = vst [vmem:[#allocation2 + $0x10] sm:$0xff] %v383
    %422 = vst [vmem:[#allocation2 + $0x18] sm:$0xff] %v384
    %423 = vst [vmem:[#allocation2 + $0x20] sm:$0xff] %v385
    %424 = vst [vmem:[#allocation2 + $0x28] sm:$0xff] %v386
    %425 = vst [vmem:[#allocation2 + $0x30] sm:$0xff] %v387
    %426 = vst [vmem:[#allocation2 + $0x38] sm:$0xff] %v388
    %427 = vst [vmem:[#allocation2 + $0x40] sm:$0xff] %v389
    %428 = vst [vmem:[#allocation2 + $0x48] sm:$0xff] %v390
    %429 = vst [vmem:[#allocation2 + $0x50] sm:$0xff] %v391
    %430 = vst [vmem:[#allocation2 + $0x58] sm:$0xff] %v392
    %431 = vst [vmem:[#allocation2 + $0x60] sm:$0xff] %v393
    %432 = vst [vmem:[#allocation2 + $0x68] sm:$0xff] %v394
    %433 = vst [vmem:[#allocation2 + $0x70] sm:$0xff] %v395
    %434 = vst [vmem:[#allocation2 + $0x78] sm:$0xff] %v396
    %435 = vst [vmem:[#allocation2 + $0x80] sm:$0xff] %v397
    %436 = vst [vmem:[#allocation2 + $0x88] sm:$0xff] %v398
    %437 = vst [vmem:[#allocation2 + $0x90] sm:$0xff] %v399
    %438 = vst [vmem:[#allocation2 + $0x98] sm:$0xff] %v400
    %439 = vst [vmem:[#allocation2 + $0xa0] sm:$0xff] %v401
    %440 = vst [vmem:[#allocation2 + $0xa8] sm:$0xff] %v402
    %441 = vst [vmem:[#allocation2 + $0xb0] sm:$0xff] %v403
    %442 = vst [vmem:[#allocation2 + $0xb8] sm:$0xff] %v404
    %443 = vst [vmem:[#allocation2 + $0xc0] sm:$0xff] %v405
    %444 = vst [vmem:[#allocation2 + $0xc8] sm:$0xff] %v406
    %445 = vst [vmem:[#allocation2 + $0xd0] sm:$0xff] %v407
    %446 = vst [vmem:[#allocation2 + $0xd8] sm:$0xff] %v408
    %447 = vst [vmem:[#allocation2 + $0xe0] sm:$0xff] %v409
    %448 = vst [vmem:[#allocation2 + $0xe8] sm:$0xff] %v410
    %449 = vst [vmem:[#allocation2 + $0xf0] sm:$0xff] %v411
    %450 = vst [vmem:[#allocation2 + $0xf8] sm:$0xff] %v412
    %451 = vst [vmem:[#allocation2 + $0x100] sm:$0xff] %v413
    %452 = vst [vmem:[#allocation2 + $0x108] sm:$0xff] %v414
    %453 = vst [vmem:[#allocation2 + $0x110] sm:$0xff] %v415
    %454 = vst [vmem:[#allocation2 + $0x118] sm:$0xff] %v416
    %455 = vst [vmem:[#allocation2 + $0x120] sm:$0xff] %v417
    %456 = vst [vmem:[#allocation2 + $0x128] sm:$0xff] %v418
    %v457 = vld [vmem:[%s2] sm:$0xff]
    %v458 = vld [vmem:[%s2 + $0x8] sm:$0xff]
    %v459 = vld [vmem:[%s2 + $0x10] sm:$0xff]
    %v460 = vld [vmem:[%s2 + $0x18] sm:$0xff]
    %v461 = vld [vmem:[%s2 + $0x20] sm:$0xff]
    %v462 = vld [vmem:[%s2 + $0x28] sm:$0xff]
    %v463 = vld [vmem:[%s2 + $0x30] sm:$0xff]
    %v464 = vld [vmem:[%s2 + $0x38] sm:$0xff]
    %v465 = vld [vmem:[%s2 + $0x40] sm:$0xff]
    %v466 = vld [vmem:[%s2 + $0x48] sm:$0xff]
    %v467 = vld [vmem:[%s2 + $0x50] sm:$0xff]
    %v468 = vld [vmem:[%s2 + $0x58] sm:$0xff]
    %v469 = vld [vmem:[%s2 + $0x60] sm:$0xff]
    %v470 = vld [vmem:[%s2 + $0x68] sm:$0xff]
    %v471 = vld [vmem:[%s2 + $0x70] sm:$0xff]
    %v472 = vld [vmem:[%s2 + $0x78] sm:$0xff]
    %v473 = vld [vmem:[%s2 + $0x80] sm:$0xff]
    %v474 = vld [vmem:[%s2 + $0x88] sm:$0xff]
    %v475 = vld [vmem:[%s2 + $0x90] sm:$0xff]
    %v476 = vld [vmem:[%s2 + $0x98] sm:$0xff]
    %v477 = vld [vmem:[%s2 + $0xa0] sm:$0xff]
    %v478 = vld [vmem:[%s2 + $0xa8] sm:$0xff]
    %v479 = vld [vmem:[%s2 + $0xb0] sm:$0xff]
    %v480 = vld [vmem:[%s2 + $0xb8] sm:$0xff]
    %v481 = vld [vmem:[%s2 + $0xc0] sm:$0xff]
    %v482 = vld [vmem:[%s2 + $0xc8] sm:$0xff]
    %v483 = vld [vmem:[%s2 + $0xd0] sm:$0xff]
    %v484 = vld [vmem:[%s2 + $0xd8] sm:$0xff]
    %v485 = vld [vmem:[%s2 + $0xe0] sm:$0xff]
    %v486 = vld [vmem:[%s2 + $0xe8] sm:$0xff]
    %v487 = vld [vmem:[%s2 + $0xf0] sm:$0xff]
    %v488 = vld [vmem:[%s2 + $0xf8] sm:$0xff]
    %489 = vmatprep.subr.mxu0 0.0
    %490 = vmatpush1.xpose.msra.mxu0 %v457
    %491 = vmatprep.subr.mxu0 0.0
    %492 = vmatpush1.xpose.msra.mxu0 %v458
    %493 = vmatprep.subr.mxu0 0.0
    %494 = vmatpush1.xpose.msra.mxu0 %v459
    %495 = vmatprep.subr.mxu0 0.0
    %496 = vmatpush1.xpose.msra.mxu0 %v460
    %497 = vmatprep.subr.mxu0 0.0
    %498 = vmatpush1.xpose.msra.mxu0 %v461
    %499 = vmatprep.subr.mxu0 0.0
    %500 = vmatpush1.xpose.msra.mxu0 %v462
    %501 = vmatprep.subr.mxu0 0.0
    %502 = vmatpush1.xpose.msra.mxu0 %v463
    %503 = vmatprep.subr.mxu0 0.0
    %504 = vmatpush1.xpose.msra.mxu0 %v464
    %505 = vmatprep.subr.mxu0 0.0
    %506 = vmatpush1.xpose.msra.mxu0 %v465
    %507 = vmatprep.subr.mxu0 0.0
    %508 = vmatpush1.xpose.msra.mxu0 %v466
    %509 = vmatprep.subr.mxu0 0.0
    %510 = vmatpush1.xpose.msra.mxu0 %v467
    %511 = vmatprep.subr.mxu0 0.0
    %512 = vmatpush1.xpose.msra.mxu0 %v468
    %513 = vmatprep.subr.mxu0 0.0
    %514 = vmatpush1.xpose.msra.mxu0 %v469
    %515 = vmatprep.subr.mxu0 0.0
    %516 = vmatpush1.xpose.msra.mxu0 %v470
    %517 = vmatprep.subr.mxu0 0.0
    %518 = vmatpush1.xpose.msra.mxu0 %v471
    %519 = vmatprep.subr.mxu0 0.0
    %520 = vmatpush1.xpose.msra.mxu0 %v472
    %521 = vmatprep.subr.mxu0 0.0
    %522 = vmatpush1.xpose.msra.mxu0 %v473
    %523 = vmatprep.subr.mxu0 0.0
    %524 = vmatpush1.xpose.msra.mxu0 %v474
    %525 = vmatprep.subr.mxu0 0.0
    %526 = vmatpush1.xpose.msra.mxu0 %v475
    %527 = vmatprep.subr.mxu0 0.0
    %528 = vmatpush1.xpose.msra.mxu0 %v476
    %529 = vmatprep.subr.mxu0 0.0
    %530 = vmatpush1.xpose.msra.mxu0 %v477
    %531 = vmatprep.subr.mxu0 0.0
    %532 = vmatpush1.xpose.msra.mxu0 %v478
    %533 = vmatprep.subr.mxu0 0.0
    %534 = vmatpush1.xpose.msra.mxu0 %v479
    %535 = vmatprep.subr.mxu0 0.0
    %536 = vmatpush1.xpose.msra.mxu0 %v480
    %537 = vmatprep.subr.mxu0 0.0
    %538 = vmatpush1.xpose.msra.mxu0 %v481
    %539 = vmatprep.subr.mxu0 0.0
    %540 = vmatpush1.xpose.msra.mxu0 %v482
    %541 = vmatprep.subr.mxu0 0.0
    %542 = vmatpush1.xpose.msra.mxu0 %v483
    %543 = vmatprep.subr.mxu0 0.0
    %544 = vmatpush1.xpose.msra.mxu0 %v484
    %545 = vmatprep.subr.mxu0 0.0
    %546 = vmatpush1.xpose.msra.mxu0 %v485
    %547 = vmatprep.subr.mxu0 0.0
    %548 = vmatpush1.xpose.msra.mxu0 %v486
    %549 = vmatprep.subr.mxu0 0.0
    %550 = vmatpush1.xpose.msra.mxu0 %v487
    %551 = vmatprep.subr.mxu0 0.0
    %552 = vmatpush1.xpose.msra.mxu0 %v488
    %553 = vmatprep.mubr.f32.mxu0 0.0
    %554 = vmatmul.mubr.f32.gmra.mrb[0].mxu0 %v381
    %v555 = vpop.f32.mrb[0].mxu0
    %v556 = vadd.f32 0.0, %v555
    %v557 = vpop.f32.mrb[0].mxu0
    %v558 = vadd.f32 0.0, %v557
    %559 = vmatprep.mubr.f32.mxu0 0.0
    %560 = vmatmul.mubr.f32.gmra.mrb[0].mxu0 %v382
    %v561 = vpop.f32.mrb[0].mxu0
    %v562 = vadd.f32 0.0, %v561
    %v563 = vpop.f32.mrb[0].mxu0
    %v564 = vadd.f32 0.0, %v563
    %565 = vmatprep.mubr.f32.mxu0 0.0
    %566 = vmatmul.mubr.f32.gmra.mrb[0].mxu0 %v383
    %v567 = vpop.f32.mrb[0].mxu0
    %v568 = vadd.f32 0.0, %v567
    %v569 = vpop.f32.mrb[0].mxu0
    %v570 = vadd.f32 0.0, %v569
    %571 = vmatprep.mubr.f32.mxu0 0.0
    %572 = vmatmul.mubr.f32.gmra.mrb[0].mxu0 %v384
    %v573 = vpop.f32.mrb[0].mxu0
    %v574 = vadd.f32 0.0, %v573
    %v575 = vpop.f32.mrb[0].mxu0
    %v576 = vadd.f32 0.0, %v575
    %577 = vmatprep.mubr.f32.mxu0 0.0
    %578 = vmatmul.mubr.f32.gmra.mrb[0].mxu0 %v385
    %v579 = vpop.f32.mrb[0].mxu0
    %v580 = vadd.f32 0.0, %v579
    %v581 = vpop.f32.mrb[0].mxu0
    %v582 = vadd.f32 0.0, %v581
    %583 = vmatprep.mubr.f32.mxu0 0.0
    %584 = vmatmul.mubr.f32.gmra.mrb[0].mxu0 %v386
    %v585 = vpop.f32.mrb[0].mxu0
    %v586 = vadd.f32 0.0, %v585
    %v587 = vpop.f32.mrb[0].mxu0
    %v588 = vadd.f32 0.0, %v587
    %589 = vmatprep.mubr.f32.mxu0 0.0
    %590 = vmatmul.mubr.f32.gmra.mrb[0].mxu0 %v387
    %v591 = vpop.f32.mrb[0].mxu0
    %v592 = vadd.f32 0.0, %v591
    %v593 = vpop.f32.mrb[0].mxu0
    %v594 = vadd.f32 0.0, %v593
    %595 = vmatprep.mubr.f32.mxu0 0.0
    %596 = vmatmul.mubr.f32.gmra.mrb[0].mxu0 %v388
    %v597 = vpop.f32.mrb[0].mxu0
    %v598 = vadd.f32 0.0, %v597
    %v599 = vpop.f32.mrb[0].mxu0
    %v600 = vadd.f32 0.0, %v599
    %601 = vmatprep.mubr.f32.mxu0 0.0
    %602 = vmatmul.mubr.f32.gmra.mrb[0].mxu0 %v389
    %v603 = vpop.f32.mrb[0].mxu0
    %v604 = vadd.f32 0.0, %v603
    %v605 = vpop.f32.mrb[0].mxu0
    %v606 = vadd.f32 0.0, %v605
    %607 = vmatprep.mubr.f32.mxu0 0.0
    %608 = vmatmul.mubr.f32.gmra.mrb[0].mxu0 %v390
    %v609 = vpop.f32.mrb[0].mxu0
    %v610 = vadd.f32 0.0, %v609
    %v611 = vpop.f32.mrb[0].mxu0
    %v612 = vadd.f32 0.0, %v611
    %613 = vmatprep.mubr.f32.mxu0 0.0
    %614 = vmatmul.mubr.f32.gmra.mrb[0].mxu0 %v391
    %v615 = vpop.f32.mrb[0].mxu0
    %v616 = vadd.f32 0.0, %v615
    %v617 = vpop.f32.mrb[0].mxu0
    %v618 = vadd.f32 0.0, %v617
    %619 = vmatprep.mubr.f32.mxu0 0.0
    %620 = vmatmul.mubr.f32.gmra.mrb[0].mxu0 %v392
    %v621 = vpop.f32.mrb[0].mxu0
    %v622 = vadd.f32 0.0, %v621
    %v623 = vpop.f32.mrb[0].mxu0
    %v624 = vadd.f32 0.0, %v623
    %625 = vmatprep.mubr.f32.mxu0 0.0
    %626 = vmatmul.mubr.f32.gmra.mrb[0].mxu0 %v393
    %v627 = vpop.f32.mrb[0].mxu0
    %v628 = vadd.f32 0.0, %v627
    %v629 = vpop.f32.mrb[0].mxu0
    %v630 = vadd.f32 0.0, %v629
    %631 = vmatprep.mubr.f32.mxu0 0.0
    %632 = vmatmul.mubr.f32.gmra.mrb[0].mxu0 %v394
    %v633 = vpop.f32.mrb[0].mxu0
    %v634 = vadd.f32 0.0, %v633
    %v635 = vpop.f32.mrb[0].mxu0
    %v636 = vadd.f32 0.0, %v635
    %637 = vmatprep.mubr.f32.mxu0 0.0
    %638 = vmatmul.mubr.f32.gmra.mrb[0].mxu0 %v395
    %v639 = vpop.f32.mrb[0].mxu0
    %v640 = vadd.f32 0.0, %v639
    %v641 = vpop.f32.mrb[0].mxu0
    %v642 = vadd.f32 0.0, %v641
    %643 = vmatprep.mubr.f32.mxu0 0.0
    %644 = vmatmul.mubr.f32.gmra.mrb[0].mxu0 %v396
    %v645 = vpop.f32.mrb[0].mxu0
    %v646 = vadd.f32 0.0, %v645
    %v647 = vpop.f32.mrb[0].mxu0
    %v648 = vadd.f32 0.0, %v647
    %649 = vmatprep.mubr.f32.mxu0 0.0
    %650 = vmatmul.mubr.f32.gmra.mrb[0].mxu0 %v397
    %v651 = vpop.f32.mrb[0].mxu0
    %v652 = vadd.f32 0.0, %v651
    %v653 = vpop.f32.mrb[0].mxu0
    %v654 = vadd.f32 0.0, %v653
    %655 = vmatprep.mubr.f32.mxu0 0.0
    %656 = vmatmul.mubr.f32.gmra.mrb[0].mxu0 %v398
    %v657 = vpop.f32.mrb[0].mxu0
    %v658 = vadd.f32 0.0, %v657
    %v659 = vpop.f32.mrb[0].mxu0
    %v660 = vadd.f32 0.0, %v659
    %661 = vmatprep.mubr.f32.mxu0 0.0
    %662 = vmatmul.mubr.f32.gmra.mrb[0].mxu0 %v399
    %v663 = vpop.f32.mrb[0].mxu0
    %v664 = vadd.f32 0.0, %v663
    %v665 = vpop.f32.mrb[0].mxu0
    %v666 = vadd.f32 0.0, %v665
    %667 = vmatprep.mubr.f32.mxu0 0.0
    %668 = vmatmul.mubr.f32.gmra.mrb[0].mxu0 %v400
    %v669 = vpop.f32.mrb[0].mxu0
    %v670 = vadd.f32 0.0, %v669
    %v671 = vpop.f32.mrb[0].mxu0
    %v672 = vadd.f32 0.0, %v671
    %673 = vmatprep.mubr.f32.mxu0 0.0
    %674 = vmatmul.mubr.f32.gmra.mrb[0].mxu0 %v401
    %v675 = vpop.f32.mrb[0].mxu0
    %v676 = vadd.f32 0.0, %v675
    %v677 = vpop.f32.mrb[0].mxu0
    %v678 = vadd.f32 0.0, %v677
    %679 = vmatprep.mubr.f32.mxu0 0.0
    %680 = vmatmul.mubr.f32.gmra.mrb[0].mxu0 %v402
    %v681 = vpop.f32.mrb[0].mxu0
    %v682 = vadd.f32 0.0, %v681
    %v683 = vpop.f32.mrb[0].mxu0
    %v684 = vadd.f32 0.0, %v683
    %685 = vmatprep.mubr.f32.mxu0 0.0
    %686 = vmatmul.mubr.f32.gmra.mrb[0].mxu0 %v403
    %v687 = vpop.f32.mrb[0].mxu0
    %v688 = vadd.f32 0.0, %v687
    %v689 = vpop.f32.mrb[0].mxu0
    %v690 = vadd.f32 0.0, %v689
    %691 = vmatprep.mubr.f32.mxu0 0.0
    %692 = vmatmul.mubr.f32.gmra.mrb[0].mxu0 %v404
    %v693 = vpop.f32.mrb[0].mxu0
    %v694 = vadd.f32 0.0, %v693
    %v695 = vpop.f32.mrb[0].mxu0
    %v696 = vadd.f32 0.0, %v695
    %697 = vmatprep.mubr.f32.mxu0 0.0
    %698 = vmatmul.mubr.f32.gmra.mrb[0].mxu0 %v405
    %v699 = vpop.f32.mrb[0].mxu0
    %v700 = vadd.f32 0.0, %v699
    %v701 = vpop.f32.mrb[0].mxu0
    %v702 = vadd.f32 0.0, %v701
    %703 = vmatprep.mubr.f32.mxu0 0.0
    %704 = vmatmul.mubr.f32.gmra.mrb[0].mxu0 %v406
    %v705 = vpop.f32.mrb[0].mxu0
    %v706 = vadd.f32 0.0, %v705
    %v707 = vpop.f32.mrb[0].mxu0
    %v708 = vadd.f32 0.0, %v707
    %709 = vmatprep.mubr.f32.mxu0 0.0
    %710 = vmatmul.mubr.f32.gmra.mrb[0].mxu0 %v407
    %v711 = vpop.f32.mrb[0].mxu0
    %v712 = vadd.f32 0.0, %v711
    %v713 = vpop.f32.mrb[0].mxu0
    %v714 = vadd.f32 0.0, %v713
    %715 = vmatprep.mubr.f32.mxu0 0.0
    %716 = vmatmul.mubr.f32.gmra.mrb[0].mxu0 %v408
    %v717 = vpop.f32.mrb[0].mxu0
    %v718 = vadd.f32 0.0, %v717
    %v719 = vpop.f32.mrb[0].mxu0
    %v720 = vadd.f32 0.0, %v719
    %721 = vmatprep.mubr.f32.mxu0 0.0
    %722 = vmatmul.mubr.f32.gmra.mrb[0].mxu0 %v409
    %v723 = vpop.f32.mrb[0].mxu0
    %v724 = vadd.f32 0.0, %v723
    %v725 = vpop.f32.mrb[0].mxu0
    %v726 = vadd.f32 0.0, %v725
    %727 = vmatprep.mubr.f32.mxu0 0.0
    %728 = vmatmul.mubr.f32.gmra.mrb[0].mxu0 %v410
    %v729 = vpop.f32.mrb[0].mxu0
    %v730 = vadd.f32 0.0, %v729
    %v731 = vpop.f32.mrb[0].mxu0
    %v732 = vadd.f32 0.0, %v731
    %733 = vmatprep.mubr.f32.mxu0 0.0
    %734 = vmatmul.mubr.f32.gmra.mrb[0].mxu0 %v411
    %v735 = vpop.f32.mrb[0].mxu0
    %v736 = vadd.f32 0.0, %v735
    %v737 = vpop.f32.mrb[0].mxu0
    %v738 = vadd.f32 0.0, %v737
    %739 = vmatprep.mubr.f32.mxu0 0.0
    %740 = vmatmul.mubr.f32.gmra.mrb[0].mxu0 %v412
    %v741 = vpop.f32.mrb[0].mxu0
    %v742 = vadd.f32 0.0, %v741
    %v743 = vpop.f32.mrb[0].mxu0
    %v744 = vadd.f32 0.0, %v743
    %745 = vmatprep.mubr.f32.mxu0 0.0
    %746 = vmatmul.mubr.f32.gmra.mrb[0].mxu0 %v413
    %v747 = vpop.f32.mrb[0].mxu0
    %v748 = vadd.f32 0.0, %v747
    %v749 = vpop.f32.mrb[0].mxu0
    %v750 = vadd.f32 0.0, %v749
    %751 = vmatprep.mubr.f32.mxu0 0.0
    %752 = vmatmul.mubr.f32.gmra.mrb[0].mxu0 %v414
    %v753 = vpop.f32.mrb[0].mxu0
    %v754 = vadd.f32 0.0, %v753
    %v755 = vpop.f32.mrb[0].mxu0
    %v756 = vadd.f32 0.0, %v755
    %757 = vmatprep.mubr.f32.mxu0 0.0
    %758 = vmatmul.mubr.f32.gmra.mrb[0].mxu0 %v415
    %v759 = vpop.f32.mrb[0].mxu0
    %v760 = vadd.f32 0.0, %v759
    %v761 = vpop.f32.mrb[0].mxu0
    %v762 = vadd.f32 0.0, %v761
    %763 = vmatprep.mubr.f32.mxu0 0.0
    %764 = vmatmul.mubr.f32.gmra.mrb[0].mxu0 %v416
    %v765 = vpop.f32.mrb[0].mxu0
    %v766 = vadd.f32 0.0, %v765
    %v767 = vpop.f32.mrb[0].mxu0
    %v768 = vadd.f32 0.0, %v767
    %769 = vmatprep.mubr.f32.mxu0 0.0
    %770 = vmatmul.mubr.f32.gmra.mrb[0].mxu0 %v417
    %v771 = vpop.f32.mrb[0].mxu0
    %v772 = vadd.f32 0.0, %v771
    %v773 = vpop.f32.mrb[0].mxu0
    %v774 = vadd.f32 0.0, %v773
    %775 = vmatprep.mubr.f32.mxu0 0.0
    %776 = vmatmul.mubr.f32.gmra.mrb[0].mxu0 %v418
    %v777 = vpop.f32.mrb[0].mxu0
    %v778 = vadd.f32 0.0, %v777
    %v779 = vpop.f32.mrb[0].mxu0
    %v780 = vadd.f32 0.0, %v779
    %781 = vdwg.mxu0
    %v782 = vmul.f32 %v556, 0.5
    %v783 = vmul.f32 %v558, 0.5
    %v784 = vmul.f32 %v562, 0.5
    %v785 = vmul.f32 %v564, 0.5
    %v786 = vmul.f32 %v568, 0.5
    %v787 = vmul.f32 %v570, 0.5
    %v788 = vmul.f32 %v574, 0.5
    %v789 = vmul.f32 %v576, 0.5
    %v790 = vmul.f32 %v580, 0.5
    %v791 = vmul.f32 %v582, 0.5
    %v792 = vmul.f32 %v586, 0.5
    %v793 = vmul.f32 %v588, 0.5
    %v794 = vmul.f32 %v592, 0.5
    %v795 = vmul.f32 %v594, 0.5
    %v796 = vmul.f32 %v598, 0.5
    %v797 = vmul.f32 %v600, 0.5
    %v798 = vmul.f32 %v604, 0.5
    %v799 = vmul.f32 %v606, 0.5
    %v800 = vmul.f32 %v610, 0.5
    %v801 = vmul.f32 %v612, 0.5
    %v802 = vmul.f32 %v616, 0.5
    %v803 = vmul.f32 %v618, 0.5
    %v804 = vmul.f32 %v622, 0.5
    %v805 = vmul.f32 %v624, 0.5
    %v806 = vmul.f32 %v628, 0.5
    %v807 = vmul.f32 %v630, 0.5
    %v808 = vmul.f32 %v634, 0.5
    %v809 = vmul.f32 %v636, 0.5
    %v810 = vmul.f32 %v640, 0.5
    %v811 = vmul.f32 %v642, 0.5
    %v812 = vmul.f32 %v646, 0.5
    %v813 = vmul.f32 %v648, 0.5
    %v814 = vmul.f32 %v652, 0.5
    %v815 = vmul.f32 %v654, 0.5
    %v816 = vmul.f32 %v658, 0.5
    %v817 = vmul.f32 %v660, 0.5
    %v818 = vmul.f32 %v664, 0.5
    %v819 = vmul.f32 %v666, 0.5
    %v820 = vmul.f32 %v670, 0.5
    %v821 = vmul.f32 %v672, 0.5
    %v822 = vmul.f32 %v676, 0.5
    %v823 = vmul.f32 %v678, 0.5
    %v824 = vmul.f32 %v682, 0.5
    %v825 = vmul.f32 %v684, 0.5
    %v826 = vmul.f32 %v688, 0.5
    %v827 = vmul.f32 %v690, 0.5
    %v828 = vmul.f32 %v694, 0.5
    %v829 = vmul.f32 %v696, 0.5
    %v830 = vmul.f32 %v700, 0.5
    %v831 = vmul.f32 %v702, 0.5
    %v832 = vmul.f32 %v706, 0.5
    %v833 = vmul.f32 %v708, 0.5
    %v834 = vmul.f32 %v712, 0.5
    %v835 = vmul.f32 %v714, 0.5
    %v836 = vmul.f32 %v718, 0.5
    %v837 = vmul.f32 %v720, 0.5
    %v838 = vmul.f32 %v724, 0.5
    %v839 = vmul.f32 %v726, 0.5
    %v840 = vmul.f32 %v730, 0.5
    %v841 = vmul.f32 %v732, 0.5
    %v842 = vmul.f32 %v736, 0.5
    %v843 = vmul.f32 %v738, 0.5
    %v844 = vmul.f32 %v742, 0.5
    %v845 = vmul.f32 %v744, 0.5
    %v846 = vmul.f32 %v748, 0.5
    %v847 = vmul.f32 %v750, 0.5
    %v848 = vmul.f32 %v754, 0.5
    %v849 = vmul.f32 %v756, 0.5
    %v850 = vmul.f32 %v760, 0.5
    %v851 = vmul.f32 %v762, 0.5
    %v852 = vmul.f32 %v766, 0.5
    %v853 = vmul.f32 %v768, 0.5
    %v854 = vmul.f32 %v772, 0.5
    %v855 = vmul.f32 %v774, 0.5
    %v856 = vmul.f32 %v778, 0.5
    %v857 = vmul.f32 %v780, 0.5
    %v858 = vtanh.pop %v782
    %v859 = vtanh.pop %v783
    %v860 = vtanh.pop %v784
    %v861 = vtanh.pop %v785
    %v862 = vtanh.pop %v786
    %v863 = vtanh.pop %v787
    %v864 = vtanh.pop %v788
    %v865 = vtanh.pop %v789
    %v866 = vtanh.pop %v790
    %v867 = vtanh.pop %v791
    %v868 = vtanh.pop %v792
    %v869 = vtanh.pop %v793
    %v870 = vtanh.pop %v794
    %v871 = vtanh.pop %v795
    %v872 = vtanh.pop %v796
    %v873 = vtanh.pop %v797
    %v874 = vtanh.pop %v798
    %v875 = vtanh.pop %v799
    %v876 = vtanh.pop %v800
    %v877 = vtanh.pop %v801
    %v878 = vtanh.pop %v802
    %v879 = vtanh.pop %v803
    %v880 = vtanh.pop %v804
    %v881 = vtanh.pop %v805
    %v882 = vtanh.pop %v806
    %v883 = vtanh.pop %v807
    %v884 = vtanh.pop %v808
    %v885 = vtanh.pop %v809
    %v886 = vtanh.pop %v810
    %v887 = vtanh.pop %v811
    %v888 = vtanh.pop %v812
    %v889 = vtanh.pop %v813
    %v890 = vtanh.pop %v814
    %v891 = vtanh.pop %v815
    %v892 = vtanh.pop %v816
    %v893 = vtanh.pop %v817
    %v894 = vtanh.pop %v818
    %v895 = vtanh.pop %v819
    %v896 = vtanh.pop %v820
    %v897 = vtanh.pop %v821
    %v898 = vtanh.pop %v822
    %v899 = vtanh.pop %v823
    %v900 = vtanh.pop %v824
    %v901 = vtanh.pop %v825
    %v902 = vtanh.pop %v826
    %v903 = vtanh.pop %v827
    %v904 = vtanh.pop %v828
    %v905 = vtanh.pop %v829
    %v906 = vtanh.pop %v830
    %v907 = vtanh.pop %v831
    %v908 = vtanh.pop %v832
    %v909 = vtanh.pop %v833
    %v910 = vtanh.pop %v834
    %v911 = vtanh.pop %v835
    %v912 = vtanh.pop %v836
    %v913 = vtanh.pop %v837
    %v914 = vtanh.pop %v838
    %v915 = vtanh.pop %v839
    %v916 = vtanh.pop %v840
    %v917 = vtanh.pop %v841
    %v918 = vtanh.pop %v842
    %v919 = vtanh.pop %v843
    %v920 = vtanh.pop %v844
    %v921 = vtanh.pop %v845
    %v922 = vtanh.pop %v846
    %v923 = vtanh.pop %v847
    %v924 = vtanh.pop %v848
    %v925 = vtanh.pop %v849
    %v926 = vtanh.pop %v850
    %v927 = vtanh.pop %v851
    %v928 = vtanh.pop %v852
    %v929 = vtanh.pop %v853
    %v930 = vtanh.pop %v854
    %v931 = vtanh.pop %v855
    %v932 = vtanh.pop %v856
    %v933 = vtanh.pop %v857
    %v934 = vadd.f32 %v858, 1.0
    %v935 = vadd.f32 %v859, 1.0
    %v936 = vadd.f32 %v860, 1.0
    %v937 = vadd.f32 %v861, 1.0
    %v938 = vadd.f32 %v862, 1.0
    %v939 = vadd.f32 %v863, 1.0
    %v940 = vadd.f32 %v864, 1.0
    %v941 = vadd.f32 %v865, 1.0
    %v942 = vadd.f32 %v866, 1.0
    %v943 = vadd.f32 %v867, 1.0
    %v944 = vadd.f32 %v868, 1.0
    %v945 = vadd.f32 %v869, 1.0
    %v946 = vadd.f32 %v870, 1.0
    %v947 = vadd.f32 %v871, 1.0
    %v948 = vadd.f32 %v872, 1.0
    %v949 = vadd.f32 %v873, 1.0
    %v950 = vadd.f32 %v874, 1.0
    %v951 = vadd.f32 %v875, 1.0
    %v952 = vadd.f32 %v876, 1.0
    %v953 = vadd.f32 %v877, 1.0
    %v954 = vadd.f32 %v878, 1.0
    %v955 = vadd.f32 %v879, 1.0
    %v956 = vadd.f32 %v880, 1.0
    %v957 = vadd.f32 %v881, 1.0
    %v958 = vadd.f32 %v882, 1.0
    %v959 = vadd.f32 %v883, 1.0
    %v960 = vadd.f32 %v884, 1.0
    %v961 = vadd.f32 %v885, 1.0
    %v962 = vadd.f32 %v886, 1.0
    %v963 = vadd.f32 %v887, 1.0
    %v964 = vadd.f32 %v888, 1.0
    %v965 = vadd.f32 %v889, 1.0
    %v966 = vadd.f32 %v890, 1.0
    %v967 = vadd.f32 %v891, 1.0
    %v968 = vadd.f32 %v892, 1.0
    %v969 = vadd.f32 %v893, 1.0
    %v970 = vadd.f32 %v894, 1.0
    %v971 = vadd.f32 %v895, 1.0
    %v972 = vadd.f32 %v896, 1.0
    %v973 = vadd.f32 %v897, 1.0
    %v974 = vadd.f32 %v898, 1.0
    %v975 = vadd.f32 %v899, 1.0
    %v976 = vadd.f32 %v900, 1.0
    %v977 = vadd.f32 %v901, 1.0
    %v978 = vadd.f32 %v902, 1.0
    %v979 = vadd.f32 %v903, 1.0
    %v980 = vadd.f32 %v904, 1.0
    %v981 = vadd.f32 %v905, 1.0
    %v982 = vadd.f32 %v906, 1.0
    %v983 = vadd.f32 %v907, 1.0
    %v984 = vadd.f32 %v908, 1.0
    %v985 = vadd.f32 %v909, 1.0
    %v986 = vadd.f32 %v910, 1.0
    %v987 = vadd.f32 %v911, 1.0
    %v988 = vadd.f32 %v912, 1.0
    %v989 = vadd.f32 %v913, 1.0
    %v990 = vadd.f32 %v914, 1.0
    %v991 = vadd.f32 %v915, 1.0
    %v992 = vadd.f32 %v916, 1.0
    %v993 = vadd.f32 %v917, 1.0
    %v994 = vadd.f32 %v918, 1.0
    %v995 = vadd.f32 %v919, 1.0
    %v996 = vadd.f32 %v920, 1.0
    %v997 = vadd.f32 %v921, 1.0
    %v998 = vadd.f32 %v922, 1.0
    %v999 = vadd.f32 %v923, 1.0
    %v1000 = vadd.f32 %v924, 1.0
    %v1001 = vadd.f32 %v925, 1.0
    %v1002 = vadd.f32 %v926, 1.0
    %v1003 = vadd.f32 %v927, 1.0
    %v1004 = vadd.f32 %v928, 1.0
    %v1005 = vadd.f32 %v929, 1.0
    %v1006 = vadd.f32 %v930, 1.0
    %v1007 = vadd.f32 %v931, 1.0
    %v1008 = vadd.f32 %v932, 1.0
    %v1009 = vadd.f32 %v933, 1.0
    %v1010 = vmul.f32 %v934, 0.5
    %v1011 = vmul.f32 %v935, 0.5
    %v1012 = vmul.f32 %v936, 0.5
    %v1013 = vmul.f32 %v937, 0.5
    %v1014 = vmul.f32 %v938, 0.5
    %v1015 = vmul.f32 %v939, 0.5
    %v1016 = vmul.f32 %v940, 0.5
    %v1017 = vmul.f32 %v941, 0.5
    %v1018 = vmul.f32 %v942, 0.5
    %v1019 = vmul.f32 %v943, 0.5
    %v1020 = vmul.f32 %v944, 0.5
    %v1021 = vmul.f32 %v945, 0.5
    %v1022 = vmul.f32 %v946, 0.5
    %v1023 = vmul.f32 %v947, 0.5
    %v1024 = vmul.f32 %v948, 0.5
    %v1025 = vmul.f32 %v949, 0.5
    %v1026 = vmul.f32 %v950, 0.5
    %v1027 = vmul.f32 %v951, 0.5
    %v1028 = vmul.f32 %v952, 0.5
    %v1029 = vmul.f32 %v953, 0.5
    %v1030 = vmul.f32 %v954, 0.5
    %v1031 = vmul.f32 %v955, 0.5
    %v1032 = vmul.f32 %v956, 0.5
    %v1033 = vmul.f32 %v957, 0.5
    %v1034 = vmul.f32 %v958, 0.5
    %v1035 = vmul.f32 %v959, 0.5
    %v1036 = vmul.f32 %v960, 0.5
    %v1037 = vmul.f32 %v961, 0.5
    %v1038 = vmul.f32 %v962, 0.5
    %v1039 = vmul.f32 %v963, 0.5
    %v1040 = vmul.f32 %v964, 0.5
    %v1041 = vmul.f32 %v965, 0.5
    %v1042 = vmul.f32 %v966, 0.5
    %v1043 = vmul.f32 %v967, 0.5
    %v1044 = vmul.f32 %v968, 0.5
    %v1045 = vmul.f32 %v969, 0.5
    %v1046 = vmul.f32 %v970, 0.5
    %v1047 = vmul.f32 %v971, 0.5
    %v1048 = vmul.f32 %v972, 0.5
    %v1049 = vmul.f32 %v973, 0.5
    %v1050 = vmul.f32 %v974, 0.5
    %v1051 = vmul.f32 %v975, 0.5
    %v1052 = vmul.f32 %v976, 0.5
    %v1053 = vmul.f32 %v977, 0.5
    %v1054 = vmul.f32 %v978, 0.5
    %v1055 = vmul.f32 %v979, 0.5
    %v1056 = vmul.f32 %v980, 0.5
    %v1057 = vmul.f32 %v981, 0.5
    %v1058 = vmul.f32 %v982, 0.5
    %v1059 = vmul.f32 %v983, 0.5
    %v1060 = vmul.f32 %v984, 0.5
    %v1061 = vmul.f32 %v985, 0.5
    %v1062 = vmul.f32 %v986, 0.5
    %v1063 = vmul.f32 %v987, 0.5
    %v1064 = vmul.f32 %v988, 0.5
    %v1065 = vmul.f32 %v989, 0.5
    %v1066 = vmul.f32 %v990, 0.5
    %v1067 = vmul.f32 %v991, 0.5
    %v1068 = vmul.f32 %v992, 0.5
    %v1069 = vmul.f32 %v993, 0.5
    %v1070 = vmul.f32 %v994, 0.5
    %v1071 = vmul.f32 %v995, 0.5
    %v1072 = vmul.f32 %v996, 0.5
    %v1073 = vmul.f32 %v997, 0.5
    %v1074 = vmul.f32 %v998, 0.5
    %v1075 = vmul.f32 %v999, 0.5
    %v1076 = vmul.f32 %v1000, 0.5
    %v1077 = vmul.f32 %v1001, 0.5
    %v1078 = vmul.f32 %v1002, 0.5
    %v1079 = vmul.f32 %v1003, 0.5
    %v1080 = vmul.f32 %v1004, 0.5
    %v1081 = vmul.f32 %v1005, 0.5
    %v1082 = vmul.f32 %v1006, 0.5
    %v1083 = vmul.f32 %v1007, 0.5
    %v1084 = vmul.f32 %v1008, 0.5
    %v1085 = vmul.f32 %v1009, 0.5
    %1086 = vst [vmem:[#allocation4] sm:$0xff] %v1010
    %1087 = vst [vmem:[#allocation4 + $0x8] sm:$0xff] %v1011
    %1088 = vst [vmem:[#allocation4 + $0x10] sm:$0xff] %v1012
    %1089 = vst [vmem:[#allocation4 + $0x18] sm:$0xff] %v1013
    %1090 = vst [vmem:[#allocation4 + $0x20] sm:$0xff] %v1014
    %1091 = vst [vmem:[#allocation4 + $0x28] sm:$0xff] %v1015
    %1092 = vst [vmem:[#allocation4 + $0x30] sm:$0xff] %v1016
    %1093 = vst [vmem:[#allocation4 + $0x38] sm:$0xff] %v1017
    %1094 = vst [vmem:[#allocation4 + $0x40] sm:$0xff] %v1018
    %1095 = vst [vmem:[#allocation4 + $0x48] sm:$0xff] %v1019
    %1096 = vst [vmem:[#allocation4 + $0x50] sm:$0xff] %v1020
    %1097 = vst [vmem:[#allocation4 + $0x58] sm:$0xff] %v1021
    %1098 = vst [vmem:[#allocation4 + $0x60] sm:$0xff] %v1022
    %1099 = vst [vmem:[#allocation4 + $0x68] sm:$0xff] %v1023
    %1100 = vst [vmem:[#allocation4 + $0x70] sm:$0xff] %v1024
    %1101 = vst [vmem:[#allocation4 + $0x78] sm:$0xff] %v1025
    %1102 = vst [vmem:[#allocation4 + $0x80] sm:$0xff] %v1026
    %1103 = vst [vmem:[#allocation4 + $0x88] sm:$0xff] %v1027
    %1104 = vst [vmem:[#allocation4 + $0x90] sm:$0xff] %v1028
    %1105 = vst [vmem:[#allocation4 + $0x98] sm:$0xff] %v1029
    %1106 = vst [vmem:[#allocation4 + $0xa0] sm:$0xff] %v1030
    %1107 = vst [vmem:[#allocation4 + $0xa8] sm:$0xff] %v1031
    %1108 = vst [vmem:[#allocation4 + $0xb0] sm:$0xff] %v1032
    %1109 = vst [vmem:[#allocation4 + $0xb8] sm:$0xff] %v1033
    %1110 = vst [vmem:[#allocation4 + $0xc0] sm:$0xff] %v1034
    %1111 = vst [vmem:[#allocation4 + $0xc8] sm:$0xff] %v1035
    %1112 = vst [vmem:[#allocation4 + $0xd0] sm:$0xff] %v1036
    %1113 = vst [vmem:[#allocation4 + $0xd8] sm:$0xff] %v1037
    %1114 = vst [vmem:[#allocation4 + $0xe0] sm:$0xff] %v1038
    %1115 = vst [vmem:[#allocation4 + $0xe8] sm:$0xff] %v1039
    %1116 = vst [vmem:[#allocation4 + $0xf0] sm:$0xff] %v1040
    %1117 = vst [vmem:[#allocation4 + $0xf8] sm:$0xff] %v1041
    %1118 = vst [vmem:[#allocation4 + $0x100] sm:$0xff] %v1042
    %1119 = vst [vmem:[#allocation4 + $0x108] sm:$0xff] %v1043
    %1120 = vst [vmem:[#allocation4 + $0x110] sm:$0xff] %v1044
    %1121 = vst [vmem:[#allocation4 + $0x118] sm:$0xff] %v1045
    %1122 = vst [vmem:[#allocation4 + $0x120] sm:$0xff] %v1046
    %1123 = vst [vmem:[#allocation4 + $0x128] sm:$0xff] %v1047
    %1124 = vst [vmem:[#allocation4 + $0x130] sm:$0xff] %v1048
    %1125 = vst [vmem:[#allocation4 + $0x138] sm:$0xff] %v1049
    %1126 = vst [vmem:[#allocation4 + $0x140] sm:$0xff] %v1050
    %1127 = vst [vmem:[#allocation4 + $0x148] sm:$0xff] %v1051
    %1128 = vst [vmem:[#allocation4 + $0x150] sm:$0xff] %v1052
    %1129 = vst [vmem:[#allocation4 + $0x158] sm:$0xff] %v1053
    %1130 = vst [vmem:[#allocation4 + $0x160] sm:$0xff] %v1054
    %1131 = vst [vmem:[#allocation4 + $0x168] sm:$0xff] %v1055
    %1132 = vst [vmem:[#allocation4 + $0x170] sm:$0xff] %v1056
    %1133 = vst [vmem:[#allocation4 + $0x178] sm:$0xff] %v1057
    %1134 = vst [vmem:[#allocation4 + $0x180] sm:$0xff] %v1058
    %1135 = vst [vmem:[#allocation4 + $0x188] sm:$0xff] %v1059
    %1136 = vst [vmem:[#allocation4 + $0x190] sm:$0xff] %v1060
    %1137 = vst [vmem:[#allocation4 + $0x198] sm:$0xff] %v1061
    %1138 = vst [vmem:[#allocation4 + $0x1a0] sm:$0xff] %v1062
    %1139 = vst [vmem:[#allocation4 + $0x1a8] sm:$0xff] %v1063
    %1140 = vst [vmem:[#allocation4 + $0x1b0] sm:$0xff] %v1064
    %1141 = vst [vmem:[#allocation4 + $0x1b8] sm:$0xff] %v1065
    %1142 = vst [vmem:[#allocation4 + $0x1c0] sm:$0xff] %v1066
    %1143 = vst [vmem:[#allocation4 + $0x1c8] sm:$0xff] %v1067
    %1144 = vst [vmem:[#allocation4 + $0x1d0] sm:$0xff] %v1068
    %1145 = vst [vmem:[#allocation4 + $0x1d8] sm:$0xff] %v1069
    %1146 = vst [vmem:[#allocation4 + $0x1e0] sm:$0xff] %v1070
    %1147 = vst [vmem:[#allocation4 + $0x1e8] sm:$0xff] %v1071
    %1148 = vst [vmem:[#allocation4 + $0x1f0] sm:$0xff] %v1072
    %1149 = vst [vmem:[#allocation4 + $0x1f8] sm:$0xff] %v1073
    %1150 = vst [vmem:[#allocation4 + $0x200] sm:$0xff] %v1074
    %1151 = vst [vmem:[#allocation4 + $0x208] sm:$0xff] %v1075
    %1152 = vst [vmem:[#allocation4 + $0x210] sm:$0xff] %v1076
    %1153 = vst [vmem:[#allocation4 + $0x218] sm:$0xff] %v1077
    %1154 = vst [vmem:[#allocation4 + $0x220] sm:$0xff] %v1078
    %1155 = vst [vmem:[#allocation4 + $0x228] sm:$0xff] %v1079
    %1156 = vst [vmem:[#allocation4 + $0x230] sm:$0xff] %v1080
    %1157 = vst [vmem:[#allocation4 + $0x238] sm:$0xff] %v1081
    %1158 = vst [vmem:[#allocation4 + $0x240] sm:$0xff] %v1082
    %1159 = vst [vmem:[#allocation4 + $0x248] sm:$0xff] %v1083
    %1160 = vst [vmem:[#allocation4 + $0x250] sm:$0xff] %v1084
    %1161 = vst [vmem:[#allocation4 + $0x258] sm:$0xff] %v1085
    // Predicated region
    $region14: #{contractive_autoencoder_forward.1} parent=1 // pred_check
      _
    $region15: #{contractive_autoencoder_forward.1} parent=1 // pred_check_branch
      %1163 = sbr.rel (0) target = $region17
    $region16: #{contractive_autoencoder_forward.1} parent=1 // pred_region
      %s1165 = ssub.s32 4864, 4864
      %1166 = vsyncadd [#allocation3], %s1165
      %s1167 = sshll.u32 [#allocation2], 4
      %s1168 = int_to_ptr.vmem [resolvable:$true] %s1167
      %1173 = dma.vmem_to_hbm [thread:$0]  %s1168, 4864, %s3, [#allocation3], 128, 128, 8
    $region17: #{contractive_autoencoder_forward.1} parent=1 // pred_fallthru
      _
    // Predicated region
    $region18: #{contractive_autoencoder_forward.1} parent=1 // pred_check
      _
    $region19: #{contractive_autoencoder_forward.1} parent=1 // pred_check_branch
      %1175 = sbr.rel (0) target = $region21
    $region20: #{contractive_autoencoder_forward.1} parent=1 // pred_region
      %s1177 = ssub.s32 9728, 9728
      %1178 = vsyncadd [#allocation5], %s1177
      %s1179 = sshll.u32 [#allocation4], 4
      %s1180 = int_to_ptr.vmem [resolvable:$true] %s1179
      %1185 = dma.vmem_to_hbm [thread:$0]  %s1180, 9728, %s4, [#allocation5], 256, 256, 16
    $region21: #{contractive_autoencoder_forward.1} parent=1 // pred_fallthru
      _
    // Predicated region
    $region22: #{contractive_autoencoder_forward.1} parent=1 // pred_check
      _
    $region23: #{contractive_autoencoder_forward.1} parent=1 // pred_check_branch
      %1187 = sbr.rel (0) target = $region25
    $region24: #{contractive_autoencoder_forward.1} parent=1 // pred_region
      %1188 = dma.done [#allocation3], 4864
    $region25: #{contractive_autoencoder_forward.1} parent=1 // pred_fallthru
      _
    // Predicated region
    $region26: #{contractive_autoencoder_forward.1} parent=1 // pred_check
      _
    $region27: #{contractive_autoencoder_forward.1} parent=1 // pred_check_branch
      %1190 = sbr.rel (0) target = $region29
    $region28: #{contractive_autoencoder_forward.1} parent=1 // pred_region
      %1191 = dma.done [#allocation5], 9728
    $region29: #{contractive_autoencoder_forward.1} parent=1 // pred_fallthru
      _
    %1192 = vsyncpa [#allocation3], 1
    %1193 = vsyncpa [#allocation5], 1

</llo_original>
